<compile_context>
chip_gen: v6e
topology: v6e:2x2x1
jax: 0.10.0
libtpu: 0.0.40
codegen_flags: <defaults>
</compile_context>

<pallas_src>
import math

import jax
import jax.numpy as jnp
from jax.experimental import pallas as pl
from jax.experimental.pallas import tpu as pltpu


def _round_up(x, m):
    return (x + m - 1) // m * m


def _device_info():
    """Returns (vmem_limit_bytes, tile_budget_bytes, two_tensorcores)."""
    kind = ""
    try:
        kind = jax.devices()[0].device_kind.lower()
    except Exception:
        pass
    two_cores = ("v7" in kind) or ("v4" in kind) or ("v5p" in kind)
    if "v7" in kind:
        # v7x: 64 MiB physical VMEM per TensorCore; leave compiler headroom.
        return 40 * 1024 * 1024, 34 * 1024 * 1024, two_cores
    if any(v in kind for v in ("v4", "v5", "v6")):
        # 128 MiB physical VMEM; the 32 MiB scoped default badly underuses it.
        return 96 * 1024 * 1024, 80 * 1024 * 1024, two_cores
    # Unknown / no TPU visible: stay conservative.
    return 48 * 1024 * 1024, 40 * 1024 * 1024, two_cores


def _vmem_bytes(tm, tk, tn, D, w2_bufs):
    return (2 * tm * tk * 2          # x tile, double-buffered bf16
            + 2 * tk * D * 2         # w1 chunk, double-buffered bf16
            + tm * D * 4             # f32 accumulator scratch
            + D * 4                  # b1 (single-buffered f32)
            + w2_bufs * D * tn * 2   # head weight block
            + w2_bufs * tn * 4       # head bias block
            + 2 * tm * tn * 4)       # out tile, double-buffered f32


def _choose_tiles(n_total, F, D, K, tm_target, tk_target, budget, two_cores):
    sublane = 16   # bf16 sublane packing
    lane = 256     # v6e/v7x MXU width (multiple of the 128-lane vreg)

    n_pad16 = _round_up(n_total, sublane)

    # --- K (head output) tiling: keep the w2 block modest enough to be resident.
    w2_cap = min(8 * 1024 * 1024, budget // 4)
    if D * K * 2 <= w2_cap:
        tn, K_pad = K, K
    else:
        tn = max(128, (w2_cap // (2 * D)) // 128 * 128)
        K_pad = _round_up(K, tn)
    n_j = K_pad // tn

    # --- F (contraction) tiling: pad F to a multiple of 256 and take the largest
    # multiple-of-256 tile <= tk_target dividing it (fewer k steps => fewer f32
    # accumulator round-trips and less grid-step overhead).
    F_pad = _round_up(F, lane)
    tk_cands = [t for t in range(lane, min(tk_target, F_pad) + 1, lane)
                if F_pad % t == 0]
    tk = tk_cands[-1]

    # --- Row tiling: biggest multiple-of-16 tile <= tm_target with <=12.5% padded
    # row waste (amortizes the per-row-tile w1 restream without padding blowup).
    tm = sublane
    t = sublane
    while t <= min(tm_target, n_pad16):
        padded = _round_up(n_pad16, t)
        if (padded - n_pad16) * 8 <= padded:
            tm = t
        t += sublane

    # --- Shrink until the pipelined working set fits the per-generation budget.
    w2_bufs = 1 if n_j == 1 else 2
    while _vmem_bytes(tm, tk, tn, D, w2_bufs) > budget:
        if len(tk_cands) > 1:
            tk_cands.pop()
            tk = tk_cands[-1]
        elif tm > sublane:
            tm = max(sublane, (tm // 2) // sublane * sublane)
        else:
            break

    n_pad = _round_up(n_pad16, tm)

    # --- Dual-TensorCore chips: the 'parallel' row axis is sharded across cores;
    # avoid a 1/odd row-tile count idling one core when the batch is tiny.
    rt = n_pad // tm
    if two_cores and rt % 2 == 1 and rt <= 3 and tm % 16 == 0:
        tm //= 2

    return tm, tk, tn, n_pad, F_pad, K_pad


def _multicrop_kernel(x_ref, w1_ref, b1_ref, w2_ref, b2_ref, out_ref, acc_ref):
    """Fused backbone (Linear F->D + GELU) and head (Linear D->K).

    Grid: (row_tiles, k_out_tiles, f_chunks). F (contraction) is the trailing
    'arbitrary' axis; partial products accumulate into a f32 VMEM scratch; the
    epilogue (bias + GELU + head matmul + bias) runs once per (row, K) tile.
    """
    k = pl.program_id(2)

    @pl.when(k == 0)
    def _():
        acc_ref[...] = jnp.zeros_like(acc_ref)

    # Backbone matmul chunk on the MXU (bf16 inputs, f32 accumulation).
    acc_ref[...] += jnp.dot(
        x_ref[...], w1_ref[...], preferred_element_type=jnp.float32
    )

    @pl.when(k == pl.num_programs(2) - 1)
    def _():
        # Epilogue in f32: bias + GELU on VPU/EUP (v5e has no bf16 path there).
        h = acc_ref[...] + b1_ref[...]
        # TODO(synk): PyTorch nn.GELU defaults to the exact erf form; the tanh
        # approximation is used here for guaranteed Mosaic lowering.
        h = jax.nn.gelu(h, approximate=True)
        logits = jnp.dot(
            h.astype(w2_ref.dtype), w2_ref[...],
            preferred_element_type=jnp.float32,
        )
        out_ref[...] = (logits + b2_ref[...]).astype(out_ref.dtype)


def multicrop_forward(crops, w1, b1, w2, b2, *, tm_target=512, tk_target=2048):
    """crops: list of (B, C, H, W) arrays (same shape). Returns n_crops (B, K) logits."""
    # TODO(synk): the real MultiCropWrapper groups crops by resolution and runs the
    # backbone per group; here all crops must share (C, H, W), and the backbone/head
    # are synthetic (Linear+GELU / Linear) since the module is generic over them.
    n_crops = len(crops)
    compute_dtype = jnp.bfloat16   # MXU ~2x throughput + half the HBM bytes

    # Cast to bf16 FIRST, then flatten + concat (torch.cat along batch) + pad,
    # so wrapper-side HBM passes over the activations run at half width.
    feat = jnp.concatenate(
        [c.astype(compute_dtype).reshape(c.shape[0], -1) for c in crops], axis=0)
    n_total, F = feat.shape
    D = w1.shape[1]
    K = w2.shape[1]

    vmem_limit, budget, two_cores = _device_info()
    tm, tk, tn, n_pad, F_pad, K_pad = _choose_tiles(
        n_total, F, D, K, tm_target, tk_target, budget, two_cores)

    if n_pad != n_total or F_pad != F:
        feat = jnp.pad(feat, ((0, n_pad - n_total), (0, F_pad - F)))

    w1_c = w1.astype(compute_dtype)
    w2_c = w2.astype(compute_dtype)
    b1_2d = b1.reshape(1, D).astype(jnp.float32)
    b2_2d = b2.reshape(1, K).astype(jnp.float32)
    if F_pad != F:
        w1_c = jnp.pad(w1_c, ((0, F_pad - F), (0, 0)))
    if K_pad != K:
        w2_c = jnp.pad(w2_c, ((0, 0), (0, K_pad - K)))
        b2_2d = jnp.pad(b2_2d, ((0, 0), (0, K_pad - K)))

    n_i = n_pad // tm
    n_j = K_pad // tn
    n_k = F_pad // tk
    grid = (n_i, n_j, n_k)

    # Constant-index inputs get a single pipeline buffer (no wasted 2x VMEM).
    resident = pl.Buffered(1)
    if n_j == 1:
        head_w_spec = pl.BlockSpec((D, tn), lambda i, j, k: (0, j),
                                   pipeline_mode=resident)
        head_b_spec = pl.BlockSpec((1, tn), lambda i, j, k: (0, j),
                                   pipeline_mode=resident)
    else:
        head_w_spec = pl.BlockSpec((D, tn), lambda i, j, k: (0, j))
        head_b_spec = pl.BlockSpec((1, tn), lambda i, j, k: (0, j))

    in_specs = [
        pl.BlockSpec((tm, tk), lambda i, j, k: (i, k)),    # activations stream
        pl.BlockSpec((tk, D), lambda i, j, k: (k, 0)),     # backbone weight chunk
        pl.BlockSpec((1, D), lambda i, j, k: (0, 0),       # backbone bias (resident)
                     pipeline_mode=resident),
        head_w_spec,                                       # head weight
        head_b_spec,                                       # head bias
    ]

    cost = pl.CostEstimate(
        flops=2 * n_pad * F_pad * D * n_j + 2 * n_pad * D * K_pad,
        transcendentals=n_pad * D * n_j,
        bytes_accessed=(
            n_pad * F_pad * 2 * n_j                 # activations (re-read per K tile)
            + F_pad * D * 2 * n_i * n_j             # w1 re-streamed per (row, K) tile
            + D * K_pad * 2 * (n_i if n_j > 1 else 1)
            + D * 4 + K_pad * 4
            + n_pad * K_pad * 4                     # logits writeback
        ),
    )

    logits = pl.pallas_call(
        _multicrop_kernel,
        out_shape=jax.ShapeDtypeStruct((n_pad, K_pad), jnp.float32),
        grid_spec=pltpu.PrefetchScalarGridSpec(
            num_scalar_prefetch=0,
            grid=grid,
            in_specs=in_specs,
            out_specs=pl.BlockSpec((tm, tn), lambda i, j, k: (i, j)),
            scratch_shapes=[pltpu.VMEM((tm, D), jnp.float32)],
        ),
        compiler_params=pltpu.CompilerParams(
            dimension_semantics=("parallel", "parallel", "arbitrary"),
            vmem_limit_bytes=vmem_limit,
        ),
        cost_estimate=cost,
    )(feat, w1_c, b1_2d, w2_c, b2_2d)

    logits = logits[:n_total, :K]
    # logits.chunk(n_crops) along dim 0
    return tuple(jnp.split(logits, n_crops, axis=0))


def _init_params(key, F, D, K):
    # Deterministic synthetic weights (nn.Linear-style uniform init).
    k1, k2, k3, k4 = jax.random.split(key, 4)
    lim1 = 1.0 / math.sqrt(F)
    lim2 = 1.0 / math.sqrt(D)
    w1 = jax.random.uniform(k1, (F, D), jnp.float32, -lim1, lim1)
    b1 = jax.random.uniform(k2, (D,), jnp.float32, -lim1, lim1)
    w2 = jax.random.uniform(k3, (D, K), jnp.float32, -lim2, lim2)
    b2 = jax.random.uniform(k4, (K,), jnp.float32, -lim2, lim2)
    return w1, b1, w2, b2


if __name__ == "__main__":
    # Small shapes: 3 crops of (batch=2, channels=4, H=16, W=16) -> F = 4*16*16 = 1024
    B, C, H, W = 2, 4, 16, 16
    n_crops = 3
    F_dim = C * H * W
    D_dim = 128   # backbone cls-embedding width
    K_dim = 128   # head output (logits) width

    key = jax.random.PRNGKey(0)
    k_crops, k_params = jax.random.split(key)
    crop_keys = jax.random.split(k_crops, n_crops)
    crops = [jax.random.normal(k, (B, C, H, W), jnp.float32) for k in crop_keys]

    w1, b1, w2, b2 = _init_params(k_params, F_dim, D_dim, K_dim)

    forward = jax.jit(multicrop_forward, static_argnames=("tm_target", "tk_target"))
    chunks = forward(crops, w1, b1, w2, b2)
    chunks = jax.block_until_ready(chunks)

    assert len(chunks) == n_crops
    assert all(c.shape == (B, K_dim) for c in chunks)

    # Reference in plain JAX with the same bf16-input / f32-accumulate math.
    # NOTE: this validates the kernel against bf16/tanh-GELU math; the fp32
    # erf-GELU PyTorch module differs at the ~1e-2 level for these magnitudes.
    feat_ref = jnp.concatenate([c.reshape(B, -1) for c in crops], axis=0)
    fb = feat_ref.astype(jnp.bfloat16)
    w1b = w1.astype(jnp.bfloat16)
    w2b = w2.astype(jnp.bfloat16)
    h_ref = jax.nn.gelu(
        jnp.dot(fb, w1b, preferred_element_type=jnp.float32) + b1,
        approximate=True,
    )
    logits_ref = jnp.dot(
        h_ref.astype(jnp.bfloat16), w2b, preferred_element_type=jnp.float32
    ) + b2
    ref_chunks = jnp.split(logits_ref, n_crops, axis=0)
    for got, want in zip(chunks, ref_chunks):
        err = float(jnp.max(jnp.abs(got - want)))
        assert jnp.allclose(got, want, atol=2e-2, rtol=2e-2), err

    print("KERNEL_OK")
</pallas_src>

<mosaic_0001>
module attributes {stable_mosaic.version = 11 : i64} {
  func.func @_multicrop_kernel(%arg0: i32, %arg1: i32, %arg2: i32, %arg3: memref<16x1024xbf16, #tpu.memory_space<vmem>>, %arg4: memref<1024x128xbf16, #tpu.memory_space<vmem>>, %arg5: memref<1x128xf32, #tpu.memory_space<vmem>>, %arg6: memref<128x128xbf16, #tpu.memory_space<vmem>>, %arg7: memref<1x128xf32, #tpu.memory_space<vmem>>, %arg8: memref<16x128xf32, #tpu.memory_space<vmem>>, %arg9: memref<16x128xf32, #tpu.memory_space<vmem>>) attributes {dimension_semantics = [#tpu.dimension_semantics<parallel>, #tpu.dimension_semantics<parallel>, #tpu.dimension_semantics<arbitrary>], iteration_bounds = array<i64: 1, 1, 1>, scalar_prefetch = 0 : i64, scratch_operands = 1 : i64, tpu.core_type = #tpu.core_type<tc>, window_params = [{transform_indices = @transform_0, window_bounds = array<i64: 16, 1024>}, {transform_indices = @transform_1, window_bounds = array<i64: 1024, 128>}, {pipeline_mode = #tpu.pipeline_mode<synchronous>, transform_indices = @transform_2, window_bounds = array<i64: 1, 128>}, {pipeline_mode = #tpu.pipeline_mode<synchronous>, transform_indices = @transform_3, window_bounds = array<i64: 128, 128>}, {pipeline_mode = #tpu.pipeline_mode<synchronous>, transform_indices = @transform_4, window_bounds = array<i64: 1, 128>}, {transform_indices = @transform_5, window_bounds = array<i64: 16, 128>}]} {
    %c0_i32 = arith.constant 0 : i32
    %0 = arith.cmpi eq, %arg2, %c0_i32 : i32
    %1 = arith.extui %0 : i1 to i32
    %c0_i32_0 = arith.constant 0 : i32
    %2 = arith.cmpi ne, %1, %c0_i32_0 : i32
    scf.if %2 {
      %cst_10 = arith.constant 0.000000e+00 : f32
      %12 = vector.broadcast %cst_10 : f32 to vector<16x128xf32>
      %c0_11 = arith.constant 0 : index
      %c0_12 = arith.constant 0 : index
      %13 = vector.load %arg9[%c0_11, %c0_12] : memref<16x128xf32, #tpu.memory_space<vmem>>, vector<16x128xf32>
      tpu.vector_store %arg9[%c0_11, %c0_12], %12 {strides = array<i32>} : memref<16x128xf32, #tpu.memory_space<vmem>>, vector<16x128xf32>,
    } else {
    }
    %c0 = arith.constant 0 : index
    %c0_1 = arith.constant 0 : index
    %3 = vector.load %arg9[%c0, %c0_1] : memref<16x128xf32, #tpu.memory_space<vmem>>, vector<16x128xf32>
    %c0_2 = arith.constant 0 : index
    %c0_3 = arith.constant 0 : index
    %4 = vector.load %arg3[%c0_2, %c0_3] : memref<16x1024xbf16, #tpu.memory_space<vmem>>, vector<16x1024xbf16>
    %c0_4 = arith.constant 0 : index
    %c0_5 = arith.constant 0 : index
    %5 = vector.load %arg4[%c0_4, %c0_5] : memref<1024x128xbf16, #tpu.memory_space<vmem>>, vector<1024x128xbf16>
    %cst = arith.constant dense<0.000000e+00> : vector<16x128xf32>
    %6 = tpu.matmul %4, %5, %cst {dimension_numbers = #tpu.dot_dimension_numbers<[1], [0], [0], [1], [0, 0, 1, 1], [], []>} : vector<16x1024xbf16>, vector<1024x128xbf16>, vector<16x128xf32> -> vector<16x128xf32>
    %7 = arith.addf %3, %6 : vector<16x128xf32>
    %c0_6 = arith.constant 0 : index
    %c0_7 = arith.constant 0 : index
    %8 = vector.load %arg9[%c0_6, %c0_7] : memref<16x128xf32, #tpu.memory_space<vmem>>, vector<16x128xf32>
    tpu.vector_store %arg9[%c0_6, %c0_7], %7 {strides = array<i32>} : memref<16x128xf32, #tpu.memory_space<vmem>>, vector<16x128xf32>,
    %c0_i32_8 = arith.constant 0 : i32
    %9 = arith.cmpi eq, %arg2, %c0_i32_8 : i32
    %10 = arith.extui %9 : i1 to i32
    %c0_i32_9 = arith.constant 0 : i32
    %11 = arith.cmpi ne, %10, %c0_i32_9 : i32
    scf.if %11 {
      %c0_10 = arith.constant 0 : index
      %c0_11 = arith.constant 0 : index
      %12 = vector.load %arg9[%c0_10, %c0_11] : memref<16x128xf32, #tpu.memory_space<vmem>>, vector<16x128xf32>
      %c0_12 = arith.constant 0 : index
      %c0_13 = arith.constant 0 : index
      %13 = vector.load %arg5[%c0_12, %c0_13] : memref<1x128xf32, #tpu.memory_space<vmem>>, vector<1x128xf32>
      %14 = vector.broadcast %13 : vector<1x128xf32> to vector<16x128xf32>
      %15 = arith.addf %12, %14 : vector<16x128xf32>
      %16 = arith.mulf %15, %15 : vector<16x128xf32>
      %17 = arith.mulf %15, %16 : vector<16x128xf32>
      %cst_14 = arith.constant 4.471500e-02 : f32
      %18 = vector.broadcast %cst_14 : f32 to vector<16x128xf32>
      %19 = arith.mulf %18, %17 : vector<16x128xf32>
      %20 = arith.addf %15, %19 : vector<16x128xf32>
      %cst_15 = arith.constant 0.797884583 : f32
      %21 = vector.broadcast %cst_15 : f32 to vector<16x128xf32>
      %22 = arith.mulf %21, %20 : vector<16x128xf32>
      %23 = math.tanh %22 : vector<16x128xf32>
      %cst_16 = arith.constant 1.000000e+00 : f32
      %24 = vector.broadcast %cst_16 : f32 to vector<16x128xf32>
      %25 = arith.addf %24, %23 : vector<16x128xf32>
      %cst_17 = arith.constant 5.000000e-01 : f32
      %26 = vector.broadcast %cst_17 : f32 to vector<16x128xf32>
      %27 = arith.mulf %26, %25 : vector<16x128xf32>
      %28 = arith.mulf %15, %27 : vector<16x128xf32>
      %29 = arith.truncf %28 : vector<16x128xf32> to vector<16x128xbf16>
      %c0_18 = arith.constant 0 : index
      %c0_19 = arith.constant 0 : index
      %30 = vector.load %arg6[%c0_18, %c0_19] : memref<128x128xbf16, #tpu.memory_space<vmem>>, vector<128x128xbf16>
      %cst_20 = arith.constant dense<0.000000e+00> : vector<16x128xf32>
      %31 = tpu.matmul %29, %30, %cst_20 {dimension_numbers = #tpu.dot_dimension_numbers<[1], [0], [0], [1], [0, 0, 1, 1], [], []>} : vector<16x128xbf16>, vector<128x128xbf16>, vector<16x128xf32> -> vector<16x128xf32>
      %c0_21 = arith.constant 0 : index
      %c0_22 = arith.constant 0 : index
      %32 = vector.load %arg7[%c0_21, %c0_22] : memref<1x128xf32, #tpu.memory_space<vmem>>, vector<1x128xf32>
      %33 = vector.broadcast %32 : vector<1x128xf32> to vector<16x128xf32>
      %34 = arith.addf %31, %33 : vector<16x128xf32>
      %c0_23 = arith.constant 0 : index
      %c0_24 = arith.constant 0 : index
      %35 = vector.load %arg8[%c0_23, %c0_24] : memref<16x128xf32, #tpu.memory_space<vmem>>, vector<16x128xf32>
      tpu.vector_store %arg8[%c0_23, %c0_24], %34 {strides = array<i32>} : memref<16x128xf32, #tpu.memory_space<vmem>>, vector<16x128xf32>,
    } else {
    }
    return
  }
  func.func @transform_0(%arg0: i32, %arg1: i32, %arg2: i32) -> (i32, i32) {
    %c0_i32 = arith.constant 0 : i32
    return %arg0, %arg2 : i32, i32
  }
  func.func @transform_1(%arg0: i32, %arg1: i32, %arg2: i32) -> (i32, i32) {
    %c0_i32 = arith.constant 0 : i32
    %c0_i32_0 = arith.constant 0 : i32
    return %arg2, %c0_i32 : i32, i32
  }
  func.func @transform_2(%arg0: i32, %arg1: i32, %arg2: i32) -> (i32, i32) {
    %c0_i32 = arith.constant 0 : i32
    %c0_i32_0 = arith.constant 0 : i32
    %c0_i32_1 = arith.constant 0 : i32
    return %c0_i32, %c0_i32_0 : i32, i32
  }
  func.func @transform_3(%arg0: i32, %arg1: i32, %arg2: i32) -> (i32, i32) {
    %c0_i32 = arith.constant 0 : i32
    %c0_i32_0 = arith.constant 0 : i32
    return %c0_i32, %arg1 : i32, i32
  }
  func.func @transform_4(%arg0: i32, %arg1: i32, %arg2: i32) -> (i32, i32) {
    %c0_i32 = arith.constant 0 : i32
    %c0_i32_0 = arith.constant 0 : i32
    return %c0_i32, %arg1 : i32, i32
  }
  func.func @transform_5(%arg0: i32, %arg1: i32, %arg2: i32) -> (i32, i32) {
    %c0_i32 = arith.constant 0 : i32
    return %arg0, %arg1 : i32, i32
  }
}

</mosaic_0001>

<llo_original>
// kernel: multicrop_forward.1
$region0: #{multicrop_forward.1}
  #allocation0 [shape = 'u32[]', space=smem, size = 0x4, offset = 0x4, fixed_abs, tag = 'smem constant byte address 0x4 - core index']
  #allocation1 [shape = 'u32[144,128]{1,0:T(1,128)}', space=vmem, size = 0x12000, scoped, tag = 'internal scratch']
  #allocation2 [shape = 'f32[16,128]{1,0:T(8,128)}', space=vmem, size = 0x2000, scoped, tag = 'scratch operand']
  %s0 = inlined_call_operand.vmem [shape: bf16[16,1024], index: 0, kind: input, shape index: {}]
  %s1 = inlined_call_operand.vmem [shape: bf16[1024,128], index: 1, kind: input, shape index: {}]
  %s2 = inlined_call_operand.vmem [shape: f32[1,128], index: 2, kind: input, shape index: {}]
  %s3 = inlined_call_operand.vmem [shape: bf16[128,128], index: 3, kind: input, shape index: {}]
  %s4 = inlined_call_operand.vmem [shape: f32[1,128], index: 4, kind: input, shape index: {}]
  %s5 = inlined_call_operand.vmem [shape: f32[16,128], index: 5, kind: output, shape index: {}]
  %s6 = sld [smem:[#allocation0]]
  $region38: #{multicrop_forward.1} parent=0
    _
  %s8 = ssub.s32 1, %s6
  %s9 = scalar_select 0, %s8, %s6
  // Predicated region
  $region2: #{multicrop_forward.1} parent=0 // pred_check
    _
  $region3: #{multicrop_forward.1} parent=0 // pred_check_branch
    %11 = sbr.rel (0) target = $region5
  $region4: #{multicrop_forward.1} parent=0 // pred_region
    _
  $region5: #{multicrop_forward.1} parent=0 // pred_fallthru
    _
  // Predicated region
  $region6: #{multicrop_forward.1} parent=0 // pred_check
    _
  $region7: #{multicrop_forward.1} parent=0 // pred_check_branch
    %13 = sbr.rel (0) target = $region9
  $region8: #{multicrop_forward.1} parent=0 // pred_region
    _
  $region9: #{multicrop_forward.1} parent=0 // pred_fallthru
    _
  // Predicated region
  $region10: #{multicrop_forward.1} parent=0 // pred_check
    _
  $region11: #{multicrop_forward.1} parent=0 // pred_check_branch
    %15 = sbr.rel (0) target = $region13
  $region12: #{multicrop_forward.1} parent=0 // pred_region
    _
  $region13: #{multicrop_forward.1} parent=0 // pred_fallthru
    _
  // Predicated region
  $region14: #{multicrop_forward.1} parent=0 // pred_check
    _
  $region15: #{multicrop_forward.1} parent=0 // pred_check_branch
    %17 = sbr.rel (0) target = $region17
  $region16: #{multicrop_forward.1} parent=0 // pred_region
    _
  $region17: #{multicrop_forward.1} parent=0 // pred_fallthru
    _
  // Predicated region
  $region18: #{multicrop_forward.1} parent=0 // pred_check
    _
  $region19: #{multicrop_forward.1} parent=0 // pred_check_branch
    %19 = sbr.rel (0) target = $region21
  $region20: #{multicrop_forward.1} parent=0 // pred_region
    _
  $region21: #{multicrop_forward.1} parent=0 // pred_fallthru
    _
  %p21 = scmp.eq.s32.totalorder 0, 0
  // Predicated region
  $region22: #{multicrop_forward.1} parent=0 // pred_check
    %p22 = pneg %p21
  $region23: #{multicrop_forward.1} parent=0 // pred_check_branch
    %24 = sbr.rel (%p22) target = $region25
  $region24: #{multicrop_forward.1} parent=0 // pred_region
    %25 = vst [vmem:[#allocation2] sm:$0xff] 0.0
    %26 = vst [vmem:[#allocation2 + $0x8] sm:$0xff] 0.0
  $region25: #{multicrop_forward.1} parent=0 // pred_fallthru
    _
  %v27 = vld [vmem:[#allocation2] sm:$0xff]
  %v28 = vld [vmem:[#allocation2 + $0x8] sm:$0xff]
  %v29 = vld [vmem:[%s0] sm:$0xff]
  %v30 = vld [vmem:[%s0 + $0x8] sm:$0xff]
  %v31 = vld [vmem:[%s0 + $0x10] sm:$0xff]
  %v32 = vld [vmem:[%s0 + $0x18] sm:$0xff]
  %v33 = vld [vmem:[%s0 + $0x20] sm:$0xff]
  %v34 = vld [vmem:[%s0 + $0x28] sm:$0xff]
  %v35 = vld [vmem:[%s0 + $0x30] sm:$0xff]
  %v36 = vld [vmem:[%s0 + $0x38] sm:$0xff]
  %v37 = vld [vmem:[%s1] sm:$0xf]
  %v38 = vld [vmem:[%s1 + $0x4] sm:$0xf]
  %v39 = vld [vmem:[%s1 + $0x8] sm:$0xf]
  %v40 = vld [vmem:[%s1 + $0xc] sm:$0xf]
  %v41 = vld [vmem:[%s1 + $0x10] sm:$0xf]
  %v42 = vld [vmem:[%s1 + $0x14] sm:$0xf]
  %v43 = vld [vmem:[%s1 + $0x18] sm:$0xf]
  %v44 = vld [vmem:[%s1 + $0x1c] sm:$0xf]
  %v45 = vld [vmem:[%s1 + $0x20] sm:$0xf]
  %v46 = vld [vmem:[%s1 + $0x24] sm:$0xf]
  %v47 = vld [vmem:[%s1 + $0x28] sm:$0xf]
  %v48 = vld [vmem:[%s1 + $0x2c] sm:$0xf]
  %v49 = vld [vmem:[%s1 + $0x30] sm:$0xf]
  %v50 = vld [vmem:[%s1 + $0x34] sm:$0xf]
  %v51 = vld [vmem:[%s1 + $0x38] sm:$0xf]
  %v52 = vld [vmem:[%s1 + $0x3c] sm:$0xf]
  %v53 = vld [vmem:[%s1 + $0x40] sm:$0xf]
  %v54 = vld [vmem:[%s1 + $0x44] sm:$0xf]
  %v55 = vld [vmem:[%s1 + $0x48] sm:$0xf]
  %v56 = vld [vmem:[%s1 + $0x4c] sm:$0xf]
  %v57 = vld [vmem:[%s1 + $0x50] sm:$0xf]
  %v58 = vld [vmem:[%s1 + $0x54] sm:$0xf]
  %v59 = vld [vmem:[%s1 + $0x58] sm:$0xf]
  %v60 = vld [vmem:[%s1 + $0x5c] sm:$0xf]
  %v61 = vld [vmem:[%s1 + $0x60] sm:$0xf]
  %v62 = vld [vmem:[%s1 + $0x64] sm:$0xf]
  %v63 = vld [vmem:[%s1 + $0x68] sm:$0xf]
  %v64 = vld [vmem:[%s1 + $0x6c] sm:$0xf]
  %v65 = vld [vmem:[%s1 + $0x70] sm:$0xf]
  %v66 = vld [vmem:[%s1 + $0x74] sm:$0xf]
  %v67 = vld [vmem:[%s1 + $0x78] sm:$0xf]
  %v68 = vld [vmem:[%s1 + $0x7c] sm:$0xf]
  %v69 = vld [vmem:[%s1 + $0x80] sm:$0xf]
  %v70 = vld [vmem:[%s1 + $0x84] sm:$0xf]
  %v71 = vld [vmem:[%s1 + $0x88] sm:$0xf]
  %v72 = vld [vmem:[%s1 + $0x8c] sm:$0xf]
  %v73 = vld [vmem:[%s1 + $0x90] sm:$0xf]
  %v74 = vld [vmem:[%s1 + $0x94] sm:$0xf]
  %v75 = vld [vmem:[%s1 + $0x98] sm:$0xf]
  %v76 = vld [vmem:[%s1 + $0x9c] sm:$0xf]
  %v77 = vld [vmem:[%s1 + $0xa0] sm:$0xf]
  %v78 = vld [vmem:[%s1 + $0xa4] sm:$0xf]
  %v79 = vld [vmem:[%s1 + $0xa8] sm:$0xf]
  %v80 = vld [vmem:[%s1 + $0xac] sm:$0xf]
  %v81 = vld [vmem:[%s1 + $0xb0] sm:$0xf]
  %v82 = vld [vmem:[%s1 + $0xb4] sm:$0xf]
  %v83 = vld [vmem:[%s1 + $0xb8] sm:$0xf]
  %v84 = vld [vmem:[%s1 + $0xbc] sm:$0xf]
  %v85 = vld [vmem:[%s1 + $0xc0] sm:$0xf]
  %v86 = vld [vmem:[%s1 + $0xc4] sm:$0xf]
  %v87 = vld [vmem:[%s1 + $0xc8] sm:$0xf]
  %v88 = vld [vmem:[%s1 + $0xcc] sm:$0xf]
  %v89 = vld [vmem:[%s1 + $0xd0] sm:$0xf]
  %v90 = vld [vmem:[%s1 + $0xd4] sm:$0xf]
  %v91 = vld [vmem:[%s1 + $0xd8] sm:$0xf]
  %v92 = vld [vmem:[%s1 + $0xdc] sm:$0xf]
  %v93 = vld [vmem:[%s1 + $0xe0] sm:$0xf]
  %v94 = vld [vmem:[%s1 + $0xe4] sm:$0xf]
  %v95 = vld [vmem:[%s1 + $0xe8] sm:$0xf]
  %v96 = vld [vmem:[%s1 + $0xec] sm:$0xf]
  %v97 = vld [vmem:[%s1 + $0xf0] sm:$0xf]
  %v98 = vld [vmem:[%s1 + $0xf4] sm:$0xf]
  %v99 = vld [vmem:[%s1 + $0xf8] sm:$0xf]
  %v100 = vld [vmem:[%s1 + $0xfc] sm:$0xf]
  %v101 = vld [vmem:[%s1 + $0x100] sm:$0xf]
  %v102 = vld [vmem:[%s1 + $0x104] sm:$0xf]
  %v103 = vld [vmem:[%s1 + $0x108] sm:$0xf]
  %v104 = vld [vmem:[%s1 + $0x10c] sm:$0xf]
  %v105 = vld [vmem:[%s1 + $0x110] sm:$0xf]
  %v106 = vld [vmem:[%s1 + $0x114] sm:$0xf]
  %v107 = vld [vmem:[%s1 + $0x118] sm:$0xf]
  %v108 = vld [vmem:[%s1 + $0x11c] sm:$0xf]
  %v109 = vld [vmem:[%s1 + $0x120] sm:$0xf]
  %v110 = vld [vmem:[%s1 + $0x124] sm:$0xf]
  %v111 = vld [vmem:[%s1 + $0x128] sm:$0xf]
  %v112 = vld [vmem:[%s1 + $0x12c] sm:$0xf]
  %v113 = vld [vmem:[%s1 + $0x130] sm:$0xf]
  %v114 = vld [vmem:[%s1 + $0x134] sm:$0xf]
  %v115 = vld [vmem:[%s1 + $0x138] sm:$0xf]
  %v116 = vld [vmem:[%s1 + $0x13c] sm:$0xf]
  %v117 = vld [vmem:[%s1 + $0x140] sm:$0xf]
  %v118 = vld [vmem:[%s1 + $0x144] sm:$0xf]
  %v119 = vld [vmem:[%s1 + $0x148] sm:$0xf]
  %v120 = vld [vmem:[%s1 + $0x14c] sm:$0xf]
  %v121 = vld [vmem:[%s1 + $0x150] sm:$0xf]
  %v122 = vld [vmem:[%s1 + $0x154] sm:$0xf]
  %v123 = vld [vmem:[%s1 + $0x158] sm:$0xf]
  %v124 = vld [vmem:[%s1 + $0x15c] sm:$0xf]
  %v125 = vld [vmem:[%s1 + $0x160] sm:$0xf]
  %v126 = vld [vmem:[%s1 + $0x164] sm:$0xf]
  %v127 = vld [vmem:[%s1 + $0x168] sm:$0xf]
  %v128 = vld [vmem:[%s1 + $0x16c] sm:$0xf]
  %v129 = vld [vmem:[%s1 + $0x170] sm:$0xf]
  %v130 = vld [vmem:[%s1 + $0x174] sm:$0xf]
  %v131 = vld [vmem:[%s1 + $0x178] sm:$0xf]
  %v132 = vld [vmem:[%s1 + $0x17c] sm:$0xf]
  %v133 = vld [vmem:[%s1 + $0x180] sm:$0xf]
  %v134 = vld [vmem:[%s1 + $0x184] sm:$0xf]
  %v135 = vld [vmem:[%s1 + $0x188] sm:$0xf]
  %v136 = vld [vmem:[%s1 + $0x18c] sm:$0xf]
  %v137 = vld [vmem:[%s1 + $0x190] sm:$0xf]
  %v138 = vld [vmem:[%s1 + $0x194] sm:$0xf]
  %v139 = vld [vmem:[%s1 + $0x198] sm:$0xf]
  %v140 = vld [vmem:[%s1 + $0x19c] sm:$0xf]
  %v141 = vld [vmem:[%s1 + $0x1a0] sm:$0xf]
  %v142 = vld [vmem:[%s1 + $0x1a4] sm:$0xf]
  %v143 = vld [vmem:[%s1 + $0x1a8] sm:$0xf]
  %v144 = vld [vmem:[%s1 + $0x1ac] sm:$0xf]
  %v145 = vld [vmem:[%s1 + $0x1b0] sm:$0xf]
  %v146 = vld [vmem:[%s1 + $0x1b4] sm:$0xf]
  %v147 = vld [vmem:[%s1 + $0x1b8] sm:$0xf]
  %v148 = vld [vmem:[%s1 + $0x1bc] sm:$0xf]
  %v149 = vld [vmem:[%s1 + $0x1c0] sm:$0xf]
  %v150 = vld [vmem:[%s1 + $0x1c4] sm:$0xf]
  %v151 = vld [vmem:[%s1 + $0x1c8] sm:$0xf]
  %v152 = vld [vmem:[%s1 + $0x1cc] sm:$0xf]
  %v153 = vld [vmem:[%s1 + $0x1d0] sm:$0xf]
  %v154 = vld [vmem:[%s1 + $0x1d4] sm:$0xf]
  %v155 = vld [vmem:[%s1 + $0x1d8] sm:$0xf]
  %v156 = vld [vmem:[%s1 + $0x1dc] sm:$0xf]
  %v157 = vld [vmem:[%s1 + $0x1e0] sm:$0xf]
  %v158 = vld [vmem:[%s1 + $0x1e4] sm:$0xf]
  %v159 = vld [vmem:[%s1 + $0x1e8] sm:$0xf]
  %v160 = vld [vmem:[%s1 + $0x1ec] sm:$0xf]
  %v161 = vld [vmem:[%s1 + $0x1f0] sm:$0xf]
  %v162 = vld [vmem:[%s1 + $0x1f4] sm:$0xf]
  %v163 = vld [vmem:[%s1 + $0x1f8] sm:$0xf]
  %v164 = vld [vmem:[%s1 + $0x1fc] sm:$0xf]
  %v173 = vunpack.c.l.b16 %v29
  %v174 = vunpack.c.h.b16 %v29
  %v175 = vunpack.c.l.b16 %v30
  %v176 = vunpack.c.h.b16 %v30
  %v177 = vunpack.c.l.b16 %v31
  %v178 = vunpack.c.h.b16 %v31
  %v179 = vunpack.c.l.b16 %v32
  %v180 = vunpack.c.h.b16 %v32
  %v181 = vunpack.c.l.b16 %v33
  %v182 = vunpack.c.h.b16 %v33
  %v183 = vunpack.c.l.b16 %v34
  %v184 = vunpack.c.h.b16 %v34
  %v185 = vunpack.c.l.b16 %v35
  %v186 = vunpack.c.h.b16 %v35
  %v187 = vunpack.c.l.b16 %v36
  %v188 = vunpack.c.h.b16 %v36
  %v189 = vpack.c.b16 %v181, %v173
  %v190 = vpack.c.b16 %v182, %v174
  %v191 = vpack.c.b16 %v183, %v175
  %v192 = vpack.c.b16 %v184, %v176
  %v193 = vpack.c.b16 %v185, %v177
  %v194 = vpack.c.b16 %v186, %v178
  %v195 = vpack.c.b16 %v187, %v179
  %v196 = vpack.c.b16 %v188, %v180
  %v333 = vunpack.c.l.b16 %v37
  %v334 = vunpack.c.l.b16 %v38
  %v335 = vunpack.c.l.b16 %v39
  %v336 = vunpack.c.l.b16 %v40
  %v337 = vunpack.c.l.b16 %v41
  %v338 = vunpack.c.l.b16 %v42
  %v339 = vunpack.c.l.b16 %v43
  %v340 = vunpack.c.l.b16 %v44
  %v341 = vunpack.c.l.b16 %v45
  %v342 = vunpack.c.l.b16 %v46
  %v343 = vunpack.c.l.b16 %v47
  %v344 = vunpack.c.l.b16 %v48
  %v345 = vunpack.c.l.b16 %v49
  %v346 = vunpack.c.l.b16 %v50
  %v347 = vunpack.c.l.b16 %v51
  %v348 = vunpack.c.l.b16 %v52
  %v349 = vunpack.c.l.b16 %v53
  %v350 = vunpack.c.l.b16 %v54
  %v351 = vunpack.c.l.b16 %v55
  %v352 = vunpack.c.l.b16 %v56
  %v353 = vunpack.c.l.b16 %v57
  %v354 = vunpack.c.l.b16 %v58
  %v355 = vunpack.c.l.b16 %v59
  %v356 = vunpack.c.l.b16 %v60
  %v357 = vunpack.c.l.b16 %v61
  %v358 = vunpack.c.l.b16 %v62
  %v359 = vunpack.c.l.b16 %v63
  %v360 = vunpack.c.l.b16 %v64
  %v361 = vunpack.c.l.b16 %v65
  %v362 = vunpack.c.l.b16 %v66
  %v363 = vunpack.c.l.b16 %v67
  %v364 = vunpack.c.l.b16 %v68
  %v365 = vunpack.c.l.b16 %v69
  %v366 = vunpack.c.l.b16 %v70
  %v367 = vunpack.c.l.b16 %v71
  %v368 = vunpack.c.l.b16 %v72
  %v369 = vunpack.c.l.b16 %v73
  %v370 = vunpack.c.l.b16 %v74
  %v371 = vunpack.c.l.b16 %v75
  %v372 = vunpack.c.l.b16 %v76
  %v373 = vunpack.c.l.b16 %v77
  %v374 = vunpack.c.l.b16 %v78
  %v375 = vunpack.c.l.b16 %v79
  %v376 = vunpack.c.l.b16 %v80
  %v377 = vunpack.c.l.b16 %v81
  %v378 = vunpack.c.l.b16 %v82
  %v379 = vunpack.c.l.b16 %v83
  %v380 = vunpack.c.l.b16 %v84
  %v381 = vunpack.c.l.b16 %v85
  %v382 = vunpack.c.l.b16 %v86
  %v383 = vunpack.c.l.b16 %v87
  %v384 = vunpack.c.l.b16 %v88
  %v385 = vunpack.c.l.b16 %v89
  %v386 = vunpack.c.l.b16 %v90
  %v387 = vunpack.c.l.b16 %v91
  %v388 = vunpack.c.l.b16 %v92
  %v389 = vunpack.c.l.b16 %v93
  %v390 = vunpack.c.l.b16 %v94
  %v391 = vunpack.c.l.b16 %v95
  %v392 = vunpack.c.l.b16 %v96
  %v393 = vunpack.c.l.b16 %v97
  %v394 = vunpack.c.l.b16 %v98
  %v395 = vunpack.c.l.b16 %v99
  %v396 = vunpack.c.l.b16 %v100
  %v397 = vunpack.c.l.b16 %v101
  %v398 = vunpack.c.l.b16 %v102
  %v399 = vunpack.c.l.b16 %v103
  %v400 = vunpack.c.l.b16 %v104
  %v401 = vunpack.c.l.b16 %v105
  %v402 = vunpack.c.l.b16 %v106
  %v403 = vunpack.c.l.b16 %v107
  %v404 = vunpack.c.l.b16 %v108
  %v405 = vunpack.c.l.b16 %v109
  %v406 = vunpack.c.l.b16 %v110
  %v407 = vunpack.c.l.b16 %v111
  %v408 = vunpack.c.l.b16 %v112
  %v409 = vunpack.c.l.b16 %v113
  %v410 = vunpack.c.l.b16 %v114
  %v411 = vunpack.c.l.b16 %v115
  %v412 = vunpack.c.l.b16 %v116
  %v413 = vunpack.c.l.b16 %v117
  %v414 = vunpack.c.l.b16 %v118
  %v415 = vunpack.c.l.b16 %v119
  %v416 = vunpack.c.l.b16 %v120
  %v417 = vunpack.c.l.b16 %v121
  %v418 = vunpack.c.l.b16 %v122
  %v419 = vunpack.c.l.b16 %v123
  %v420 = vunpack.c.l.b16 %v124
  %v421 = vunpack.c.l.b16 %v125
  %v422 = vunpack.c.l.b16 %v126
  %v423 = vunpack.c.l.b16 %v127
  %v424 = vunpack.c.l.b16 %v128
  %v425 = vunpack.c.l.b16 %v129
  %v426 = vunpack.c.l.b16 %v130
  %v427 = vunpack.c.l.b16 %v131
  %v428 = vunpack.c.l.b16 %v132
  %v429 = vunpack.c.l.b16 %v133
  %v430 = vunpack.c.l.b16 %v134
  %v431 = vunpack.c.l.b16 %v135
  %v432 = vunpack.c.l.b16 %v136
  %v433 = vunpack.c.l.b16 %v137
  %v434 = vunpack.c.l.b16 %v138
  %v435 = vunpack.c.l.b16 %v139
  %v436 = vunpack.c.l.b16 %v140
  %v437 = vunpack.c.l.b16 %v141
  %v438 = vunpack.c.l.b16 %v142
  %v439 = vunpack.c.l.b16 %v143
  %v440 = vunpack.c.l.b16 %v144
  %v441 = vunpack.c.l.b16 %v145
  %v442 = vunpack.c.l.b16 %v146
  %v443 = vunpack.c.l.b16 %v147
  %v444 = vunpack.c.l.b16 %v148
  %v445 = vunpack.c.l.b16 %v149
  %v446 = vunpack.c.l.b16 %v150
  %v447 = vunpack.c.l.b16 %v151
  %v448 = vunpack.c.l.b16 %v152
  %v449 = vunpack.c.l.b16 %v153
  %v450 = vunpack.c.l.b16 %v154
  %v451 = vunpack.c.l.b16 %v155
  %v452 = vunpack.c.l.b16 %v156
  %v453 = vunpack.c.l.b16 %v157
  %v454 = vunpack.c.l.b16 %v158
  %v455 = vunpack.c.l.b16 %v159
  %v456 = vunpack.c.l.b16 %v160
  %v457 = vunpack.c.l.b16 %v161
  %v458 = vunpack.c.l.b16 %v162
  %v459 = vunpack.c.l.b16 %v163
  %v460 = vunpack.c.l.b16 %v164
  %v461 = vpack.c.b16 %v334, %v333
  %v462 = vpack.c.b16 %v336, %v335
  %v463 = vpack.c.b16 %v338, %v337
  %v464 = vpack.c.b16 %v340, %v339
  %v465 = vpack.c.b16 %v342, %v341
  %v466 = vpack.c.b16 %v344, %v343
  %v467 = vpack.c.b16 %v346, %v345
  %v468 = vpack.c.b16 %v348, %v347
  %v469 = vpack.c.b16 %v350, %v349
  %v470 = vpack.c.b16 %v352, %v351
  %v471 = vpack.c.b16 %v354, %v353
  %v472 = vpack.c.b16 %v356, %v355
  %v473 = vpack.c.b16 %v358, %v357
  %v474 = vpack.c.b16 %v360, %v359
  %v475 = vpack.c.b16 %v362, %v361
  %v476 = vpack.c.b16 %v364, %v363
  %v477 = vpack.c.b16 %v366, %v365
  %v478 = vpack.c.b16 %v368, %v367
  %v479 = vpack.c.b16 %v370, %v369
  %v480 = vpack.c.b16 %v372, %v371
  %v481 = vpack.c.b16 %v374, %v373
  %v482 = vpack.c.b16 %v376, %v375
  %v483 = vpack.c.b16 %v378, %v377
  %v484 = vpack.c.b16 %v380, %v379
  %v485 = vpack.c.b16 %v382, %v381
  %v486 = vpack.c.b16 %v384, %v383
  %v487 = vpack.c.b16 %v386, %v385
  %v488 = vpack.c.b16 %v388, %v387
  %v489 = vpack.c.b16 %v390, %v389
  %v490 = vpack.c.b16 %v392, %v391
  %v491 = vpack.c.b16 %v394, %v393
  %v492 = vpack.c.b16 %v396, %v395
  %v493 = vpack.c.b16 %v398, %v397
  %v494 = vpack.c.b16 %v400, %v399
  %v495 = vpack.c.b16 %v402, %v401
  %v496 = vpack.c.b16 %v404, %v403
  %v497 = vpack.c.b16 %v406, %v405
  %v498 = vpack.c.b16 %v408, %v407
  %v499 = vpack.c.b16 %v410, %v409
  %v500 = vpack.c.b16 %v412, %v411
  %v501 = vpack.c.b16 %v414, %v413
  %v502 = vpack.c.b16 %v416, %v415
  %v503 = vpack.c.b16 %v418, %v417
  %v504 = vpack.c.b16 %v420, %v419
  %v505 = vpack.c.b16 %v422, %v421
  %v506 = vpack.c.b16 %v424, %v423
  %v507 = vpack.c.b16 %v426, %v425
  %v508 = vpack.c.b16 %v428, %v427
  %v509 = vpack.c.b16 %v430, %v429
  %v510 = vpack.c.b16 %v432, %v431
  %v511 = vpack.c.b16 %v434, %v433
  %v512 = vpack.c.b16 %v436, %v435
  %v513 = vpack.c.b16 %v438, %v437
  %v514 = vpack.c.b16 %v440, %v439
  %v515 = vpack.c.b16 %v442, %v441
  %v516 = vpack.c.b16 %v444, %v443
  %v517 = vpack.c.b16 %v446, %v445
  %v518 = vpack.c.b16 %v448, %v447
  %v519 = vpack.c.b16 %v450, %v449
  %v520 = vpack.c.b16 %v452, %v451
  %v521 = vpack.c.b16 %v454, %v453
  %v522 = vpack.c.b16 %v456, %v455
  %v523 = vpack.c.b16 %v458, %v457
  %v524 = vpack.c.b16 %v460, %v459
  %589 = vmatprep.subr.bf16.mxu0 0
  %590 = vmatpush1.bf16.msra.mxu0 %v468
  %591 = vmatprep.subr.bf16.mxu0 0
  %592 = vmatpush1.bf16.msra.mxu0 %v467
  %593 = vmatprep.subr.bf16.mxu0 0
  %594 = vmatpush1.bf16.msra.mxu0 %v466
  %595 = vmatprep.subr.bf16.mxu0 0
  %596 = vmatpush1.bf16.msra.mxu0 %v465
  %597 = vmatprep.subr.bf16.mxu0 0
  %598 = vmatpush1.bf16.msra.mxu0 %v464
  %599 = vmatprep.subr.bf16.mxu0 0
  %600 = vmatpush1.bf16.msra.mxu0 %v463
  %601 = vmatprep.subr.bf16.mxu0 0
  %602 = vmatpush1.bf16.msra.mxu0 %v462
  %603 = vmatprep.subr.bf16.mxu0 0
  %604 = vmatpush1.bf16.msra.mxu0 %v461
  %605 = vmatprep.subr.bf16.mxu0 0
  %606 = vmatpush2.bf16.msra.mxu0 %v476
  %607 = vmatprep.subr.bf16.mxu0 0
  %608 = vmatpush2.bf16.msra.mxu0 %v475
  %609 = vmatprep.subr.bf16.mxu0 0
  %610 = vmatpush2.bf16.msra.mxu0 %v474
  %611 = vmatprep.subr.bf16.mxu0 0
  %612 = vmatpush2.bf16.msra.mxu0 %v473
  %613 = vmatprep.subr.bf16.mxu0 0
  %614 = vmatpush2.bf16.msra.mxu0 %v472
  %615 = vmatprep.subr.bf16.mxu0 0
  %616 = vmatpush2.bf16.msra.mxu0 %v471
  %617 = vmatprep.subr.bf16.mxu0 0
  %618 = vmatpush2.bf16.msra.mxu0 %v470
  %619 = vmatprep.subr.bf16.mxu0 0
  %620 = vmatpush2.bf16.msra.mxu0 %v469
  %621 = vmatprep.mubr.bf16.mxu0 %v190
  %622 = vmatmul.mubr.bf16.gmra.mxu0 %v189
  %v623 = vpop.f32.mrf.mxu0
  %v624 = vadd.f32 0.0, %v623
  %v625 = vpop.f32.mrf.mxu0
  %v626 = vpop.f32.mrf.mxu0
  %v627 = vadd.f32 0.0, %v626
  %v628 = vpop.f32.mrf.mxu0
  %629 = vdwg.mxu0
  %630 = vmatprep.subr.bf16.mxu0 0
  %631 = vmatpush1.bf16.msra.mxu0 %v484
  %632 = vmatprep.subr.bf16.mxu0 0
  %633 = vmatpush1.bf16.msra.mxu0 %v483
  %634 = vmatprep.subr.bf16.mxu0 0
  %635 = vmatpush1.bf16.msra.mxu0 %v482
  %636 = vmatprep.subr.bf16.mxu0 0
  %637 = vmatpush1.bf16.msra.mxu0 %v481
  %638 = vmatprep.subr.bf16.mxu0 0
  %639 = vmatpush1.bf16.msra.mxu0 %v480
  %640 = vmatprep.subr.bf16.mxu0 0
  %641 = vmatpush1.bf16.msra.mxu0 %v479
  %642 = vmatprep.subr.bf16.mxu0 0
  %643 = vmatpush1.bf16.msra.mxu0 %v478
  %644 = vmatprep.subr.bf16.mxu0 0
  %645 = vmatpush1.bf16.msra.mxu0 %v477
  %646 = vmatprep.subr.bf16.mxu0 0
  %647 = vmatpush2.bf16.msra.mxu0 %v492
  %648 = vmatprep.subr.bf16.mxu0 0
  %649 = vmatpush2.bf16.msra.mxu0 %v491
  %650 = vmatprep.subr.bf16.mxu0 0
  %651 = vmatpush2.bf16.msra.mxu0 %v490
  %652 = vmatprep.subr.bf16.mxu0 0
  %653 = vmatpush2.bf16.msra.mxu0 %v489
  %654 = vmatprep.subr.bf16.mxu0 0
  %655 = vmatpush2.bf16.msra.mxu0 %v488
  %656 = vmatprep.subr.bf16.mxu0 0
  %657 = vmatpush2.bf16.msra.mxu0 %v487
  %658 = vmatprep.subr.bf16.mxu0 0
  %659 = vmatpush2.bf16.msra.mxu0 %v486
  %660 = vmatprep.subr.bf16.mxu0 0
  %661 = vmatpush2.bf16.msra.mxu0 %v485
  %662 = vmatprep.mubr.bf16.mxu0 %v192
  %663 = vmatmul.mubr.bf16.gmra.mxu0 %v191
  %v664 = vpop.f32.mrf.mxu0
  %v665 = vadd.f32 %v624, %v664
  %v666 = vpop.f32.mrf.mxu0
  %v667 = vpop.f32.mrf.mxu0
  %v668 = vadd.f32 %v627, %v667
  %v669 = vpop.f32.mrf.mxu0
  %670 = vdwg.mxu0
  %671 = vmatprep.subr.bf16.mxu0 0
  %672 = vmatpush1.bf16.msra.mxu0 %v500
  %673 = vmatprep.subr.bf16.mxu0 0
  %674 = vmatpush1.bf16.msra.mxu0 %v499
  %675 = vmatprep.subr.bf16.mxu0 0
  %676 = vmatpush1.bf16.msra.mxu0 %v498
  %677 = vmatprep.subr.bf16.mxu0 0
  %678 = vmatpush1.bf16.msra.mxu0 %v497
  %679 = vmatprep.subr.bf16.mxu0 0
  %680 = vmatpush1.bf16.msra.mxu0 %v496
  %681 = vmatprep.subr.bf16.mxu0 0
  %682 = vmatpush1.bf16.msra.mxu0 %v495
  %683 = vmatprep.subr.bf16.mxu0 0
  %684 = vmatpush1.bf16.msra.mxu0 %v494
  %685 = vmatprep.subr.bf16.mxu0 0
  %686 = vmatpush1.bf16.msra.mxu0 %v493
  %687 = vmatprep.subr.bf16.mxu0 0
  %688 = vmatpush2.bf16.msra.mxu0 %v508
  %689 = vmatprep.subr.bf16.mxu0 0
  %690 = vmatpush2.bf16.msra.mxu0 %v507
  %691 = vmatprep.subr.bf16.mxu0 0
  %692 = vmatpush2.bf16.msra.mxu0 %v506
  %693 = vmatprep.subr.bf16.mxu0 0
  %694 = vmatpush2.bf16.msra.mxu0 %v505
  %695 = vmatprep.subr.bf16.mxu0 0
  %696 = vmatpush2.bf16.msra.mxu0 %v504
  %697 = vmatprep.subr.bf16.mxu0 0
  %698 = vmatpush2.bf16.msra.mxu0 %v503
  %699 = vmatprep.subr.bf16.mxu0 0
  %700 = vmatpush2.bf16.msra.mxu0 %v502
  %701 = vmatprep.subr.bf16.mxu0 0
  %702 = vmatpush2.bf16.msra.mxu0 %v501
  %703 = vmatprep.mubr.bf16.mxu0 %v194
  %704 = vmatmul.mubr.bf16.gmra.mxu0 %v193
  %v705 = vpop.f32.mrf.mxu0
  %v706 = vadd.f32 %v665, %v705
  %v707 = vpop.f32.mrf.mxu0
  %v708 = vpop.f32.mrf.mxu0
  %v709 = vadd.f32 %v668, %v708
  %v710 = vpop.f32.mrf.mxu0
  %711 = vdwg.mxu0
  %712 = vmatprep.subr.bf16.mxu0 0
  %713 = vmatpush1.bf16.msra.mxu0 %v516
  %714 = vmatprep.subr.bf16.mxu0 0
  %715 = vmatpush1.bf16.msra.mxu0 %v515
  %716 = vmatprep.subr.bf16.mxu0 0
  %717 = vmatpush1.bf16.msra.mxu0 %v514
  %718 = vmatprep.subr.bf16.mxu0 0
  %719 = vmatpush1.bf16.msra.mxu0 %v513
  %720 = vmatprep.subr.bf16.mxu0 0
  %721 = vmatpush1.bf16.msra.mxu0 %v512
  %722 = vmatprep.subr.bf16.mxu0 0
  %723 = vmatpush1.bf16.msra.mxu0 %v511
  %724 = vmatprep.subr.bf16.mxu0 0
  %725 = vmatpush1.bf16.msra.mxu0 %v510
  %726 = vmatprep.subr.bf16.mxu0 0
  %727 = vmatpush1.bf16.msra.mxu0 %v509
  %728 = vmatprep.subr.bf16.mxu0 0
  %729 = vmatpush2.bf16.msra.mxu0 %v524
  %730 = vmatprep.subr.bf16.mxu0 0
  %731 = vmatpush2.bf16.msra.mxu0 %v523
  %732 = vmatprep.subr.bf16.mxu0 0
  %733 = vmatpush2.bf16.msra.mxu0 %v522
  %734 = vmatprep.subr.bf16.mxu0 0
  %735 = vmatpush2.bf16.msra.mxu0 %v521
  %736 = vmatprep.subr.bf16.mxu0 0
  %737 = vmatpush2.bf16.msra.mxu0 %v520
  %738 = vmatprep.subr.bf16.mxu0 0
  %739 = vmatpush2.bf16.msra.mxu0 %v519
  %740 = vmatprep.subr.bf16.mxu0 0
  %741 = vmatpush2.bf16.msra.mxu0 %v518
  %742 = vmatprep.subr.bf16.mxu0 0
  %743 = vmatpush2.bf16.msra.mxu0 %v517
  %744 = vmatprep.mubr.bf16.mxu0 %v196
  %745 = vmatmul.mubr.bf16.gmra.mxu0 %v195
  %v746 = vpop.f32.mrf.mxu0
  %v747 = vadd.f32 %v706, %v746
  %v748 = vpop.f32.mrf.mxu0
  %v749 = vpop.f32.mrf.mxu0
  %v750 = vadd.f32 %v709, %v749
  %v751 = vpop.f32.mrf.mxu0
  %752 = vdwg.mxu0
  %v753 = vadd.f32 %v27, %v747
  %v754 = vadd.f32 %v28, %v750
  %755 = vst [vmem:[#allocation2] sm:$0xff] %v753
  %756 = vst [vmem:[#allocation2 + $0x8] sm:$0xff] %v754
  // Predicated region
  $region26: #{multicrop_forward.1} parent=0 // pred_check
    %p757 = pneg %p21
  $region27: #{multicrop_forward.1} parent=0 // pred_check_branch
    %759 = sbr.rel (%p757) target = $region29
  $region28: #{multicrop_forward.1} parent=0 // pred_region
    %v760 = vld [vmem:[#allocation2] sm:$0xff]
    %v761 = vld [vmem:[#allocation2 + $0x8] sm:$0xff]
    %v762 = vld [vmem:[%s2] sm:$0x1]
    %v764 = vlaneseq
    %v765 = vshrl.u32 %v764, 7
    %v766 = vsub.s32 0, %v765
    %v767 = vrot.slane %v762, %v766
    %v769 = vadd.f32 %v760, %v767
    %v770 = vadd.f32 %v761, %v767
    %v771 = vmul.f32 %v769, %v769
    %v772 = vmul.f32 %v770, %v770
    %v773 = vmul.f32 %v769, %v771
    %v774 = vmul.f32 %v770, %v772
    %v775 = vmul.f32 %v773, 0.044715
    %v776 = vmul.f32 %v774, 0.044715
    %v777 = vadd.f32 %v769, %v775
    %v778 = vadd.f32 %v770, %v776
    %v779 = vmul.f32 %v777, 0.7978846
    %v780 = vmul.f32 %v778, 0.7978846
    %v781 = vtanh.pop %v779
    %v782 = vtanh.pop %v780
    %v783 = vadd.f32 %v781, 1.0
    %v784 = vadd.f32 %v782, 1.0
    %v785 = vmul.f32 %v783, 0.5
    %v786 = vmul.f32 %v784, 0.5
    %v787 = vmul.f32 %v769, %v785
    %v788 = vmul.f32 %v770, %v786
    %v789 = vpack.c.bf16 %v788, %v787
    %v790 = vld [vmem:[%s3] sm:$0xf]
    %v791 = vld [vmem:[%s3 + $0x4] sm:$0xf]
    %v792 = vld [vmem:[%s3 + $0x8] sm:$0xf]
    %v793 = vld [vmem:[%s3 + $0xc] sm:$0xf]
    %v794 = vld [vmem:[%s3 + $0x10] sm:$0xf]
    %v795 = vld [vmem:[%s3 + $0x14] sm:$0xf]
    %v796 = vld [vmem:[%s3 + $0x18] sm:$0xf]
    %v797 = vld [vmem:[%s3 + $0x1c] sm:$0xf]
    %v798 = vld [vmem:[%s3 + $0x20] sm:$0xf]
    %v799 = vld [vmem:[%s3 + $0x24] sm:$0xf]
    %v800 = vld [vmem:[%s3 + $0x28] sm:$0xf]
    %v801 = vld [vmem:[%s3 + $0x2c] sm:$0xf]
    %v802 = vld [vmem:[%s3 + $0x30] sm:$0xf]
    %v803 = vld [vmem:[%s3 + $0x34] sm:$0xf]
    %v804 = vld [vmem:[%s3 + $0x38] sm:$0xf]
    %v805 = vld [vmem:[%s3 + $0x3c] sm:$0xf]
    %v806 = vld [vmem:[%s4] sm:$0x1]
    %v808 = vlaneseq
    %v809 = vshrl.u32 %v808, 7
    %v810 = vsub.s32 0, %v809
    %v811 = vrot.slane %v806, %v810
    %v829 = vunpack.c.l.b16 %v790
    %v830 = vunpack.c.l.b16 %v791
    %v831 = vunpack.c.l.b16 %v792
    %v832 = vunpack.c.l.b16 %v793
    %v833 = vunpack.c.l.b16 %v794
    %v834 = vunpack.c.l.b16 %v795
    %v835 = vunpack.c.l.b16 %v796
    %v836 = vunpack.c.l.b16 %v797
    %v837 = vunpack.c.l.b16 %v798
    %v838 = vunpack.c.l.b16 %v799
    %v839 = vunpack.c.l.b16 %v800
    %v840 = vunpack.c.l.b16 %v801
    %v841 = vunpack.c.l.b16 %v802
    %v842 = vunpack.c.l.b16 %v803
    %v843 = vunpack.c.l.b16 %v804
    %v844 = vunpack.c.l.b16 %v805
    %v845 = vpack.c.b16 %v830, %v829
    %v846 = vpack.c.b16 %v832, %v831
    %v847 = vpack.c.b16 %v834, %v833
    %v848 = vpack.c.b16 %v836, %v835
    %v849 = vpack.c.b16 %v838, %v837
    %v850 = vpack.c.b16 %v840, %v839
    %v851 = vpack.c.b16 %v842, %v841
    %v852 = vpack.c.b16 %v844, %v843
    %861 = vmatprep.subr.bf16.mxu0 0
    %862 = vmatpush1.bf16.msra.mxu0 %v852
    %863 = vmatprep.subr.bf16.mxu0 0
    %864 = vmatpush1.bf16.msra.mxu0 %v851
    %865 = vmatprep.subr.bf16.mxu0 0
    %866 = vmatpush1.bf16.msra.mxu0 %v850
    %867 = vmatprep.subr.bf16.mxu0 0
    %868 = vmatpush1.bf16.msra.mxu0 %v849
    %869 = vmatprep.subr.bf16.mxu0 0
    %870 = vmatpush1.bf16.msra.mxu0 %v848
    %871 = vmatprep.subr.bf16.mxu0 0
    %872 = vmatpush1.bf16.msra.mxu0 %v847
    %873 = vmatprep.subr.bf16.mxu0 0
    %874 = vmatpush1.bf16.msra.mxu0 %v846
    %875 = vmatprep.subr.bf16.mxu0 0
    %876 = vmatpush1.bf16.msra.mxu0 %v845
    %877 = vmatprep.subr.bf16.mxu0 0
    %878 = vmatpush2.bf16.msra.mxu0 0
    %879 = vmatprep.subr.bf16.mxu0 0
    %880 = vmatpush2.bf16.msra.mxu0 0
    %881 = vmatprep.subr.bf16.mxu0 0
    %882 = vmatpush2.bf16.msra.mxu0 0
    %883 = vmatprep.subr.bf16.mxu0 0
    %884 = vmatpush2.bf16.msra.mxu0 0
    %885 = vmatprep.subr.bf16.mxu0 0
    %886 = vmatpush2.bf16.msra.mxu0 0
    %887 = vmatprep.subr.bf16.mxu0 0
    %888 = vmatpush2.bf16.msra.mxu0 0
    %889 = vmatprep.subr.bf16.mxu0 0
    %890 = vmatpush2.bf16.msra.mxu0 0
    %891 = vmatprep.subr.bf16.mxu0 0
    %892 = vmatpush2.bf16.msra.mxu0 0
    %893 = vmatprep.mubr.bf16.mxu0 0
    %894 = vmatmul.mubr.bf16.gmra.mxu0 %v789
    %v895 = vpop.f32.mrf.mxu0
    %v896 = vadd.f32 %v811, %v895
    %v897 = vpop.f32.mrf.mxu0
    %v898 = vpop.f32.mrf.mxu0
    %v899 = vadd.f32 %v811, %v898
    %v900 = vpop.f32.mrf.mxu0
    %901 = vdwg.mxu0
    %902 = vst [vmem:[%s5] sm:$0xff] %v896
    %903 = vst [vmem:[%s5 + $0x8] sm:$0xff] %v899
  $region29: #{multicrop_forward.1} parent=0 // pred_fallthru
    _
  // Predicated region
  $region30: #{multicrop_forward.1} parent=0 // pred_check
    _
  $region31: #{multicrop_forward.1} parent=0 // pred_check_branch
    %905 = sbr.rel (0) target = $region33
  $region32: #{multicrop_forward.1} parent=0 // pred_region
    _
  $region33: #{multicrop_forward.1} parent=0 // pred_fallthru
    _
  // Predicated region
  $region34: #{multicrop_forward.1} parent=0 // pred_check
    _
  $region35: #{multicrop_forward.1} parent=0 // pred_check_branch
    %907 = sbr.rel (0) target = $region37
  $region36: #{multicrop_forward.1} parent=0 // pred_region
    _
  $region37: #{multicrop_forward.1} parent=0 // pred_fallthru
    _

</llo_original>
